<compile_context>
chip_gen: v6e
topology: v6e:2x2x1
jax: 0.10.0
libtpu: 0.0.40
codegen_flags: <defaults>
</compile_context>

<pallas_src>
import jax
import jax.numpy as jnp
from jax import lax
from jax.experimental import pallas as pl
from jax.experimental.pallas import tpu as pltpu

LANES = 128


def _tpu_config():
    """Return (num_core_slots, max_tile_rows) for the local TPU generation."""
    try:
        kind = jax.devices()[0].device_kind.lower()
    except Exception:
        return 1, 2048
    if "v7" in kind:
        # dual TensorCore per chip: shard the leading grid axis across cores
        return 2, 4096
    if "v6" in kind:
        return 1, 4096
    # v5e and older / unknown: single TC, stay well under the 16 MiB scoped VMEM
    return 1, 2048


def _sublane_multiple(dtypes):
    """Required second-to-last block-dim multiple given the input dtypes."""
    req = 8
    for dt in dtypes:
        isz = jnp.dtype(dt).itemsize
        req = max(req, {4: 8, 2: 16, 1: 32}.get(isz, 8))
    return req


def _lane_dense(x):
    """Flatten row-major and view as a (rows, 128) lane-dense slab.

    reshape of a contiguous array is free.  Only if numel % 128 != 0 do we pad
    (<=127 zeros; zeros contribute 0 to the sum of squares).
    """
    flat = x.reshape(-1)
    rem = (-flat.shape[0]) % LANES
    if rem:
        # TODO(synk): a fully zero-copy path for numel % 128 != 0 would need
        # 1-D blocks + element-level tail masking; this rare path pays one copy.
        flat = jnp.pad(flat, (0, rem))
    return flat.reshape(-1, LANES)


def _make_kernel(tile_rows, rows_valid, tiles_per_core, mask_from, need_mask):
    """Build the reduction kernel (all sizes are trace-time Python ints)."""

    def kernel(c_ref, f_ref, t_ref, out_ref, acc_ref):
        c = pl.program_id(0)   # core slot
        i = pl.program_id(1)   # tile index within this core's range

        # zero the (per-core) accumulator at the start of each core's tile range
        @pl.when(i == 0)
        def _():
            acc_ref[...] = jnp.zeros_like(acc_ref)

        # f32 math even if inputs arrive as bf16 (v5e has no bf16 VPU)
        t = t_ref[...].astype(jnp.float32)
        dc = c_ref[...].astype(jnp.float32) - t
        df = f_ref[...].astype(jnp.float32) - t
        sq = dc * dc + df * df

        if need_mask:
            # global (unclamped) tile index; rows beyond rows_valid are garbage
            # (partial last block) or belong to a phantom tile of the core split
            tile = c * tiles_per_core + i

            @pl.when(tile >= mask_from)          # last real tile + phantom tiles
            def _():
                row_ids = tile * tile_rows + lax.broadcasted_iota(
                    jnp.int32, (tile_rows, LANES), 0)
                acc_ref[...] += jnp.where(row_ids < rows_valid, sq, 0.0)

            @pl.when(tile < mask_from)           # interior tiles: no mask work
            def _():
                acc_ref[...] += sq
        else:
            acc_ref[...] += sq

        # single cross-lane/sublane reduce per core, only at the last step
        @pl.when(i == tiles_per_core - 1)
        def _():
            out_ref[0, 0] = jnp.sum(acc_ref[...])

    return kernel


def mse_loss(inputs, targets):
    """inputs: dict with 'color_coarse' and 'color_fine'; targets: same shape.
    Returns scalar f32 loss = mse(coarse, targets) + mse(fine, targets)."""
    coarse = inputs["color_coarse"]
    fine = inputs["color_fine"]
    assert coarse.shape == targets.shape and fine.shape == targets.shape

    n_elems = targets.size  # true element count for the mean

    c2 = _lane_dense(coarse)
    f2 = _lane_dense(fine)
    t2 = _lane_dense(targets)

    num_cores, max_tile_rows = _tpu_config()
    sub = _sublane_multiple([coarse.dtype, fine.dtype, targets.dtype])

    rows = c2.shape[0]
    # biggest tile that fits, capped, rounded up to the packed-sublane multiple
    tile_rows = min(max_tile_rows, ((rows + sub - 1) // sub) * sub)
    n_tiles = pl.cdiv(rows, tile_rows)
    tiles_per_core = pl.cdiv(n_tiles, num_cores)
    total_tiles = num_cores * tiles_per_core
    # first tile index that needs masking: the last (partial) real tile, or the
    # first phantom tile created by the core split if the last real tile is full
    mask_from = n_tiles - 1 if (rows % tile_rows != 0) else n_tiles
    need_mask = mask_from < total_tiles

    def in_map(c, i):
        # clamp so phantom tiles re-read the last real block (fully masked out)
        return (jnp.minimum(c * tiles_per_core + i, n_tiles - 1), 0)

    tile_spec = pl.BlockSpec((tile_rows, LANES), in_map)

    kernel = _make_kernel(tile_rows, rows, tiles_per_core, mask_from, need_mask)

    itemsize = jnp.dtype(targets.dtype).itemsize
    partial = pl.pallas_call(
        kernel,
        out_shape=jax.ShapeDtypeStruct((num_cores, 1), jnp.float32),
        grid_spec=pltpu.PrefetchScalarGridSpec(
            num_scalar_prefetch=0,
            grid=(num_cores, tiles_per_core),
            in_specs=[tile_spec, tile_spec, tile_spec],
            out_specs=pl.BlockSpec((1, 1), lambda c, i: (c, 0),
                                   memory_space=pltpu.SMEM),
            scratch_shapes=[pltpu.VMEM((tile_rows, LANES), jnp.float32)],
        ),
        compiler_params=pltpu.CompilerParams(
            dimension_semantics=("parallel", "arbitrary")),
        cost_estimate=pl.CostEstimate(
            flops=6 * n_elems,
            transcendentals=0,
            bytes_accessed=3 * n_elems * itemsize + num_cores * 4),
    )(c2, f2, t2)

    # sum_sq(coarse)/N + sum_sq(fine)/N == (per-core partial sums) / N
    return (jnp.sum(partial) / jnp.float32(n_elems)).astype(jnp.float32)


if __name__ == "__main__":
    key = jax.random.PRNGKey(0)
    k1, k2, k3, k4, k5, k6 = jax.random.split(key, 6)

    # --- test 1: f32, ray count a multiple of 128 (typical NeRF batch) ---
    n_rays = 512
    color_coarse = jax.random.uniform(k1, (n_rays, 3), dtype=jnp.float32)
    color_fine = jax.random.uniform(k2, (n_rays, 3), dtype=jnp.float32)
    targets = jax.random.uniform(k3, (n_rays, 3), dtype=jnp.float32)

    loss = mse_loss({"color_coarse": color_coarse, "color_fine": color_fine},
                    targets)
    jax.block_until_ready(loss)

    ref = (jnp.mean((color_coarse - targets) ** 2)
           + jnp.mean((color_fine - targets) ** 2))
    assert jnp.allclose(loss, ref, rtol=1e-5, atol=1e-6), (loss, ref)

    # --- test 2: bf16 inputs, element count not a multiple of 128 ---
    n_rays2 = 1000
    cc2 = jax.random.uniform(k4, (n_rays2, 3), dtype=jnp.float32).astype(jnp.bfloat16)
    cf2 = jax.random.uniform(k5, (n_rays2, 3), dtype=jnp.float32).astype(jnp.bfloat16)
    tg2 = jax.random.uniform(k6, (n_rays2, 3), dtype=jnp.float32).astype(jnp.bfloat16)

    loss2 = mse_loss({"color_coarse": cc2, "color_fine": cf2}, tg2)
    jax.block_until_ready(loss2)

    ref2 = (jnp.mean((cc2.astype(jnp.float32) - tg2.astype(jnp.float32)) ** 2)
            + jnp.mean((cf2.astype(jnp.float32) - tg2.astype(jnp.float32)) ** 2))
    assert jnp.allclose(loss2, ref2, rtol=1e-4, atol=1e-6), (loss2, ref2)

    print("KERNEL_OK")
</pallas_src>

<mosaic_0001>
module attributes {stable_mosaic.version = 11 : i64} {
  func.func @kernel(%arg0: i32, %arg1: i32, %arg2: memref<16x128xf32, #tpu.memory_space<vmem>>, %arg3: memref<16x128xf32, #tpu.memory_space<vmem>>, %arg4: memref<16x128xf32, #tpu.memory_space<vmem>>, %arg5: memref<1x1xf32, #tpu.memory_space<smem>>, %arg6: memref<16x128xf32, #tpu.memory_space<vmem>>) attributes {dimension_semantics = [#tpu.dimension_semantics<parallel>, #tpu.dimension_semantics<arbitrary>], iteration_bounds = array<i64: 1, 1>, scalar_prefetch = 0 : i64, scratch_operands = 1 : i64, tpu.core_type = #tpu.core_type<tc>, window_params = [{transform_indices = @transform_0, window_bounds = array<i64: 16, 128>}, {transform_indices = @transform_1, window_bounds = array<i64: 16, 128>}, {transform_indices = @transform_2, window_bounds = array<i64: 16, 128>}, {transform_indices = @transform_3, window_bounds = array<i64: 1, 1>}]} {
    %c0_i32 = arith.constant 0 : i32
    %0 = arith.cmpi eq, %arg1, %c0_i32 : i32
    %1 = arith.extui %0 : i1 to i32
    %c0_i32_0 = arith.constant 0 : i32
    %2 = arith.cmpi ne, %1, %c0_i32_0 : i32
    scf.if %2 {
      %cst = arith.constant 0.000000e+00 : f32
      %22 = vector.broadcast %cst : f32 to vector<16x128xf32>
      %c0_12 = arith.constant 0 : index
      %c0_13 = arith.constant 0 : index
      %23 = vector.load %arg6[%c0_12, %c0_13] : memref<16x128xf32, #tpu.memory_space<vmem>>, vector<16x128xf32>
      tpu.vector_store %arg6[%c0_12, %c0_13], %22 {strides = array<i32>} : memref<16x128xf32, #tpu.memory_space<vmem>>, vector<16x128xf32>,
    } else {
    }
    %c0 = arith.constant 0 : index
    %c0_1 = arith.constant 0 : index
    %3 = vector.load %arg4[%c0, %c0_1] : memref<16x128xf32, #tpu.memory_space<vmem>>, vector<16x128xf32>
    %c0_2 = arith.constant 0 : index
    %c0_3 = arith.constant 0 : index
    %4 = vector.load %arg2[%c0_2, %c0_3] : memref<16x128xf32, #tpu.memory_space<vmem>>, vector<16x128xf32>
    %5 = arith.subf %4, %3 : vector<16x128xf32>
    %c0_4 = arith.constant 0 : index
    %c0_5 = arith.constant 0 : index
    %6 = vector.load %arg3[%c0_4, %c0_5] : memref<16x128xf32, #tpu.memory_space<vmem>>, vector<16x128xf32>
    %7 = arith.subf %6, %3 : vector<16x128xf32>
    %8 = arith.mulf %5, %5 : vector<16x128xf32>
    %9 = arith.mulf %7, %7 : vector<16x128xf32>
    %10 = arith.addf %8, %9 : vector<16x128xf32>
    %c1_i32 = arith.constant 1 : i32
    %11 = arith.muli %arg0, %c1_i32 : i32
    %12 = arith.addi %11, %arg1 : i32
    %c0_i32_6 = arith.constant 0 : i32
    %13 = arith.cmpi sge, %12, %c0_i32_6 : i32
    %14 = arith.extui %13 : i1 to i32
    %c0_i32_7 = arith.constant 0 : i32
    %15 = arith.cmpi ne, %14, %c0_i32_7 : i32
    scf.if %15 {
      %c16_i32 = arith.constant 16 : i32
      %22 = arith.muli %12, %c16_i32 : i32
      %23 = tpu.iota {dimensions = array<i32: 0>} : vector<16x128xi32>
      %24 = vector.broadcast %22 : i32 to vector<16x128xi32>
      %25 = arith.addi %24, %23 : vector<16x128xi32>
      %c0_12 = arith.constant 0 : index
      %c0_13 = arith.constant 0 : index
      %26 = vector.load %arg6[%c0_12, %c0_13] : memref<16x128xf32, #tpu.memory_space<vmem>>, vector<16x128xf32>
      %c12_i32 = arith.constant 12 : i32
      %27 = vector.broadcast %c12_i32 : i32 to vector<16x128xi32>
      %28 = arith.cmpi slt, %25, %27 : vector<16x128xi32>
      %cst = arith.constant 0.000000e+00 : f32
      %29 = vector.broadcast %cst : f32 to vector<16x128xf32>
      %30 = arith.select %28, %10, %29 : vector<16x128xi1>, vector<16x128xf32>
      %31 = arith.addf %26, %30 : vector<16x128xf32>
      %c0_14 = arith.constant 0 : index
      %c0_15 = arith.constant 0 : index
      %32 = vector.load %arg6[%c0_14, %c0_15] : memref<16x128xf32, #tpu.memory_space<vmem>>, vector<16x128xf32>
      tpu.vector_store %arg6[%c0_14, %c0_15], %31 {strides = array<i32>} : memref<16x128xf32, #tpu.memory_space<vmem>>, vector<16x128xf32>,
    } else {
    }
    %c0_i32_8 = arith.constant 0 : i32
    %16 = arith.cmpi slt, %12, %c0_i32_8 : i32
    %17 = arith.extui %16 : i1 to i32
    %c0_i32_9 = arith.constant 0 : i32
    %18 = arith.cmpi ne, %17, %c0_i32_9 : i32
    scf.if %18 {
      %c0_12 = arith.constant 0 : index
      %c0_13 = arith.constant 0 : index
      %22 = vector.load %arg6[%c0_12, %c0_13] : memref<16x128xf32, #tpu.memory_space<vmem>>, vector<16x128xf32>
      %23 = arith.addf %22, %10 : vector<16x128xf32>
      %c0_14 = arith.constant 0 : index
      %c0_15 = arith.constant 0 : index
      %24 = vector.load %arg6[%c0_14, %c0_15] : memref<16x128xf32, #tpu.memory_space<vmem>>, vector<16x128xf32>
      tpu.vector_store %arg6[%c0_14, %c0_15], %23 {strides = array<i32>} : memref<16x128xf32, #tpu.memory_space<vmem>>, vector<16x128xf32>,
    } else {
    }
    %c0_i32_10 = arith.constant 0 : i32
    %19 = arith.cmpi eq, %arg1, %c0_i32_10 : i32
    %20 = arith.extui %19 : i1 to i32
    %c0_i32_11 = arith.constant 0 : i32
    %21 = arith.cmpi ne, %20, %c0_i32_11 : i32
    scf.if %21 {
      %c0_12 = arith.constant 0 : index
      %c0_13 = arith.constant 0 : index
      %22 = vector.load %arg6[%c0_12, %c0_13] : memref<16x128xf32, #tpu.memory_space<vmem>>, vector<16x128xf32>
      %23 = vector.shape_cast %22 : vector<16x128xf32> to vector<1x16x128xf32>
      %cst = arith.constant dense<0.000000e+00> : vector<1xf32>
      %24 = vector.multi_reduction <add>, %23, %cst [1, 2] : vector<1x16x128xf32> to vector<1xf32>
      %25 = vector.shape_cast %24 : vector<1xf32> to vector<1x1x1xf32>
      %26 = vector.extract %25[0, 0, 0] : f32 from vector<1x1x1xf32>
      %c0_14 = arith.constant 0 : index
      %c0_15 = arith.constant 0 : index
      %27 = memref.load %arg5[%c0_14, %c0_15] : memref<1x1xf32, #tpu.memory_space<smem>>
      memref.store %26, %arg5[%c0_14, %c0_15] : memref<1x1xf32, #tpu.memory_space<smem>>
    } else {
    }
    return
  }
  func.func @transform_0(%arg0: i32, %arg1: i32) -> (i32, i32) {
    %c1_i32 = arith.constant 1 : i32
    %0 = arith.muli %arg0, %c1_i32 : i32
    %1 = arith.addi %0, %arg1 : i32
    %c0_i32 = arith.constant 0 : i32
    %2 = arith.minsi %1, %c0_i32 : i32
    %c0_i32_0 = arith.constant 0 : i32
    %c0_i32_1 = arith.constant 0 : i32
    return %2, %c0_i32_0 : i32, i32
  }
  func.func @transform_1(%arg0: i32, %arg1: i32) -> (i32, i32) {
    %c1_i32 = arith.constant 1 : i32
    %0 = arith.muli %arg0, %c1_i32 : i32
    %1 = arith.addi %0, %arg1 : i32
    %c0_i32 = arith.constant 0 : i32
    %2 = arith.minsi %1, %c0_i32 : i32
    %c0_i32_0 = arith.constant 0 : i32
    %c0_i32_1 = arith.constant 0 : i32
    return %2, %c0_i32_0 : i32, i32
  }
  func.func @transform_2(%arg0: i32, %arg1: i32) -> (i32, i32) {
    %c1_i32 = arith.constant 1 : i32
    %0 = arith.muli %arg0, %c1_i32 : i32
    %1 = arith.addi %0, %arg1 : i32
    %c0_i32 = arith.constant 0 : i32
    %2 = arith.minsi %1, %c0_i32 : i32
    %c0_i32_0 = arith.constant 0 : i32
    %c0_i32_1 = arith.constant 0 : i32
    return %2, %c0_i32_0 : i32, i32
  }
  func.func @transform_3(%arg0: i32, %arg1: i32) -> (i32, i32) {
    %c0_i32 = arith.constant 0 : i32
    %c0_i32_0 = arith.constant 0 : i32
    return %arg0, %c0_i32 : i32, i32
  }
}

</mosaic_0001>

<llo_original>
// kernel: tpu_custom_call.1
$region0: #{tpu_custom_call.1}
  #allocation0 [shape = 'u32[]', space=smem, size = 0x4, offset = 0x4, fixed_abs, tag = 'smem constant byte address 0x4 - core index']
  #allocation1 [shape = 'u32[144,128]{1,0:T(1,128)}', space=vmem, size = 0x12000, scoped, tag = 'internal scratch']
  #allocation2 [shape = 'f32[16,128]{1,0:T(8,128)}', space=vmem, size = 0x2000, scoped, tag = 'scratch operand']
  %s0 = inlined_call_operand.hbm [shape: f32[12,128], index: 0, kind: input, shape index: {}]
  %s1 = inlined_call_operand.hbm [shape: f32[12,128], index: 1, kind: input, shape index: {}]
  %s2 = inlined_call_operand.hbm [shape: f32[12,128], index: 2, kind: input, shape index: {}]
  %s3 = inlined_call_operand.hbm [shape: f32[1,1], index: 3, kind: output, shape index: {}]
  %s4 = sld [smem:[#allocation0]]
  $region50: #{tpu_custom_call.1} parent=0
    _
  %s6 = ssub.s32 1, %s4
  %s7 = scalar_select 0, %s6, %s4
  $region1: #{tpu_custom_call.1} parent=0
    #allocation3 [shape = 'u8[8192]{0}', space=vmem, size = 0x2000, scoped, tag = 'input window, operand 0, single buffered']
    #allocation4 [shape = 's32[1]{0}', space=sflag, size = 0x4, scoped, tag = 'scoped memory for tpu_custom_call.1']
    #allocation5 [shape = 's32[1]{0}', space=sflag, size = 0x4, scoped, tag = 'scoped memory for tpu_custom_call.1']
    #allocation6 [shape = 'u8[8192]{0}', space=vmem, size = 0x2000, scoped, tag = 'input window, operand 1, single buffered']
    #allocation7 [shape = 's32[1]{0}', space=sflag, size = 0x4, scoped, tag = 'scoped memory for tpu_custom_call.1']
    #allocation8 [shape = 'u8[8192]{0}', space=vmem, size = 0x2000, scoped, tag = 'input window, operand 2, single buffered']
    #allocation9 [shape = 'u8[512]{0}', space=smem, size = 0x200, scoped, tag = 'output window, operand 0, single buffered']
    %8 = vsyncpa [#allocation4], 0
    %9 = vsyncpa [#allocation7], 0
    %10 = vsyncpa [#allocation5], 0
    // Predicated region
    $region2: #{tpu_custom_call.1} parent=1 // pred_check
      _
    $region3: #{tpu_custom_call.1} parent=1 // pred_check_branch
      %12 = sbr.rel (0) target = $region5
    $region4: #{tpu_custom_call.1} parent=1 // pred_region
      %s13 = sadd.s32 0, 0
      %p14 = scmp.lt.s32.totalorder %s13, 0
      %s15 = scalar_select %p14, %s13, 0
      %s16 = smul.u32 2, %s15
      %s18 = ssub.s32 256, 256
      %19 = vsyncadd [#allocation4], %s18
      %s20 = smul.addr %s16, 128
      %s21 = scalar_lea.hbm %s0, %s20
      %s22 = sshll.u32 [#allocation3], 4
      %s23 = int_to_ptr.vmem [resolvable:$true] %s22
      %28 = dma.hbm_to_vmem [thread:$0]  %s21, 256, %s23, [#allocation4], 128, 128, 8
    $region5: #{tpu_custom_call.1} parent=1 // pred_fallthru
      _
    // Predicated region
    $region6: #{tpu_custom_call.1} parent=1 // pred_check
      _
    $region7: #{tpu_custom_call.1} parent=1 // pred_check_branch
      %30 = sbr.rel (0) target = $region9
    $region8: #{tpu_custom_call.1} parent=1 // pred_region
      %s31 = sadd.s32 0, 0
      %p32 = scmp.lt.s32.totalorder %s31, 0
      %s33 = scalar_select %p32, %s31, 0
      %s34 = smul.u32 2, %s33
      %s36 = ssub.s32 256, 256
      %37 = vsyncadd [#allocation7], %s36
      %s38 = smul.addr %s34, 128
      %s39 = scalar_lea.hbm %s1, %s38
      %s40 = sshll.u32 [#allocation6], 4
      %s41 = int_to_ptr.vmem [resolvable:$true] %s40
      %46 = dma.hbm_to_vmem [thread:$0]  %s39, 256, %s41, [#allocation7], 128, 128, 8
    $region9: #{tpu_custom_call.1} parent=1 // pred_fallthru
      _
    // Predicated region
    $region10: #{tpu_custom_call.1} parent=1 // pred_check
      _
    $region11: #{tpu_custom_call.1} parent=1 // pred_check_branch
      %48 = sbr.rel (0) target = $region13
    $region12: #{tpu_custom_call.1} parent=1 // pred_region
      %s49 = sadd.s32 0, 0
      %p50 = scmp.lt.s32.totalorder %s49, 0
      %s51 = scalar_select %p50, %s49, 0
      %s52 = smul.u32 2, %s51
      %s54 = ssub.s32 256, 256
      %55 = vsyncadd [#allocation7], %s54
      %s56 = smul.addr %s52, 128
      %s57 = scalar_lea.hbm %s2, %s56
      %s58 = sshll.u32 [#allocation8], 4
      %s59 = int_to_ptr.vmem [resolvable:$true] %s58
      %64 = dma.hbm_to_vmem [thread:$0]  %s57, 256, %s59, [#allocation7], 128, 128, 8
    $region13: #{tpu_custom_call.1} parent=1 // pred_fallthru
      _
    // Predicated region
    $region14: #{tpu_custom_call.1} parent=1 // pred_check
      _
    $region15: #{tpu_custom_call.1} parent=1 // pred_check_branch
      %66 = sbr.rel (0) target = $region17
    $region16: #{tpu_custom_call.1} parent=1 // pred_region
      %67 = dma.done [#allocation4], 256
    $region17: #{tpu_custom_call.1} parent=1 // pred_fallthru
      _
    // Predicated region
    $region18: #{tpu_custom_call.1} parent=1 // pred_check
      _
    $region19: #{tpu_custom_call.1} parent=1 // pred_check_branch
      %69 = sbr.rel (0) target = $region21
    $region20: #{tpu_custom_call.1} parent=1 // pred_region
      %70 = dma.done [#allocation7], 256
    $region21: #{tpu_custom_call.1} parent=1 // pred_fallthru
      _
    // Predicated region
    $region22: #{tpu_custom_call.1} parent=1 // pred_check
      _
    $region23: #{tpu_custom_call.1} parent=1 // pred_check_branch
      %72 = sbr.rel (0) target = $region25
    $region24: #{tpu_custom_call.1} parent=1 // pred_region
      %73 = dma.done [#allocation7], 256
    $region25: #{tpu_custom_call.1} parent=1 // pred_fallthru
      _
    %s74 = sadd.s32 0, 0
    %p75 = scmp.lt.s32.totalorder %s74, 0
    %s76 = scalar_select %p75, %s74, 0
    %s77 = smul.u32 2, %s76
    %s78 = sadd.s32 0, 0
    %p79 = scmp.lt.s32.totalorder %s78, 0
    %s80 = scalar_select %p79, %s78, 0
    %s81 = smul.u32 2, %s80
    %s82 = sadd.s32 0, 0
    %p83 = scmp.lt.s32.totalorder %s82, 0
    %s84 = scalar_select %p83, %s82, 0
    %s85 = smul.u32 2, %s84
    %p86 = scmp.eq.s32.totalorder 0, 0
    // Predicated region
    $region26: #{tpu_custom_call.1} parent=1 // pred_check
      %p87 = pneg %p86
    $region27: #{tpu_custom_call.1} parent=1 // pred_check_branch
      %89 = sbr.rel (%p87) target = $region29
    $region28: #{tpu_custom_call.1} parent=1 // pred_region
      %90 = vst [vmem:[#allocation2] sm:$0xff] 0.0
      %91 = vst [vmem:[#allocation2 + $0x8] sm:$0xff] 0.0
    $region29: #{tpu_custom_call.1} parent=1 // pred_fallthru
      _
    %v92 = vld [vmem:[#allocation8] sm:$0xff]
    %v93 = vld [vmem:[#allocation8 + $0x8] sm:$0xff]
    %v94 = vld [vmem:[#allocation3] sm:$0xff]
    %v95 = vld [vmem:[#allocation3 + $0x8] sm:$0xff]
    %v96 = vsub.f32 %v94, %v92
    %v97 = vsub.f32 %v95, %v93
    %v98 = vld [vmem:[#allocation6] sm:$0xff]
    %v99 = vld [vmem:[#allocation6 + $0x8] sm:$0xff]
    %v100 = vsub.f32 %v98, %v92
    %v101 = vsub.f32 %v99, %v93
    %v102 = vmul.f32 %v96, %v96
    %v103 = vmul.f32 %v97, %v97
    %v104 = vmul.f32 %v100, %v100
    %v105 = vmul.f32 %v101, %v101
    %v106 = vadd.f32 %v102, %v104
    %v107 = vadd.f32 %v103, %v105
    %s108 = sadd.s32 0, 0
    %p109 = scmp.ge.s32.totalorder %s108, 0
    // Predicated region
    $region30: #{tpu_custom_call.1} parent=1 // pred_check
      %p110 = pneg %p109
    $region31: #{tpu_custom_call.1} parent=1 // pred_check_branch
      %112 = sbr.rel (%p110) target = $region33
    $region32: #{tpu_custom_call.1} parent=1 // pred_region
      %s113 = smul.u32 %s108, 16
      %v114 = vlaneseq
      %v115 = vshrl.u32 %v114, 7
      %v116 = vadd.s32 %v115, 8
      %v117 = vstv %s113
      %v118 = vadd.s32 %v117, %v115
      %v119 = vadd.s32 %v117, %v116
      %v120 = vld [vmem:[#allocation2] sm:$0xff]
      %v121 = vld [vmem:[#allocation2 + $0x8] sm:$0xff]
      %vm122 = vcmp.lt.s32.totalorder %v118, 12
      %vm123 = vcmp.lt.s32.totalorder %v119, 12
      %v124 = vsel %vm122, %v106, 0.0
      %v125 = vsel %vm123, %v107, 0.0
      %v126 = vadd.f32 %v120, %v124
      %v127 = vadd.f32 %v121, %v125
      %128 = vst [vmem:[#allocation2] sm:$0xff] %v126
      %129 = vst [vmem:[#allocation2 + $0x8] sm:$0xff] %v127
    $region33: #{tpu_custom_call.1} parent=1 // pred_fallthru
      _
    %p130 = scmp.lt.s32.totalorder %s108, 0
    // Predicated region
    $region34: #{tpu_custom_call.1} parent=1 // pred_check
      %p131 = pneg %p130
    $region35: #{tpu_custom_call.1} parent=1 // pred_check_branch
      %133 = sbr.rel (%p131) target = $region37
    $region36: #{tpu_custom_call.1} parent=1 // pred_region
      %v134 = vld [vmem:[#allocation2] sm:$0xff]
      %v135 = vld [vmem:[#allocation2 + $0x8] sm:$0xff]
      %v136 = vadd.f32 %v134, %v106
      %v137 = vadd.f32 %v135, %v107
      %138 = vst [vmem:[#allocation2] sm:$0xff] %v136
      %139 = vst [vmem:[#allocation2 + $0x8] sm:$0xff] %v137
    $region37: #{tpu_custom_call.1} parent=1 // pred_fallthru
      _
    // Predicated region
    $region38: #{tpu_custom_call.1} parent=1 // pred_check
      %p140 = pneg %p86
    $region39: #{tpu_custom_call.1} parent=1 // pred_check_branch
      %142 = sbr.rel (%p140) target = $region41
    $region40: #{tpu_custom_call.1} parent=1 // pred_region
      %v143 = vld [vmem:[#allocation2] sm:$0xff]
      %v144 = vld [vmem:[#allocation2 + $0x8] sm:$0xff]
      %v145 = vadd.f32 %v143, %v144
      %146 = vadd.xlane.f32.xlu0 %v145
      %v147 = vpop.xlane.xlu0 %146
      %v148 = vrot.slane %v147, 4
      %v149 = vadd.f32 %v147, %v148
      %v150 = vrot.slane %v149, 2
      %v151 = vadd.f32 %v149, %v150
      %v152 = vrot.slane %v151, 1
      %v153 = vadd.f32 %v151, %v152
      %s154 = vtos %v153
      %s155 = scalar_lea.smem [#allocation9], 0
      %156 = sst [smem:[%s155]] %s154
    $region41: #{tpu_custom_call.1} parent=1 // pred_fallthru
      _
    // Predicated region
    $region42: #{tpu_custom_call.1} parent=1 // pred_check
      _
    $region43: #{tpu_custom_call.1} parent=1 // pred_check_branch
      %158 = sbr.rel (0) target = $region45
    $region44: #{tpu_custom_call.1} parent=1 // pred_region
      %s160 = ssub.s32 16, 16
      %161 = vsyncadd [#allocation5], %s160
      %164 = dma.smem_to_hbm [#allocation9], 16, %s3, [#allocation5]
    $region45: #{tpu_custom_call.1} parent=1 // pred_fallthru
      _
    // Predicated region
    $region46: #{tpu_custom_call.1} parent=1 // pred_check
      _
    $region47: #{tpu_custom_call.1} parent=1 // pred_check_branch
      %166 = sbr.rel (0) target = $region49
    $region48: #{tpu_custom_call.1} parent=1 // pred_region
      %167 = dma.done [#allocation5], 16
    $region49: #{tpu_custom_call.1} parent=1 // pred_fallthru
      _
    %168 = sfence
    %169 = vsyncpa [#allocation4], 1
    %170 = vsyncpa [#allocation7], 1
    %171 = vsyncpa [#allocation5], 1

</llo_original>
